<compile_context>
chip_gen: v6e
topology: v6e:2x2x1
jax: 0.10.0
libtpu: 0.0.40
codegen_flags: <defaults>
</compile_context>

<pallas_src>
import functools

import jax
import jax.numpy as jnp
from jax.experimental import pallas as pl
from jax.experimental.pallas import tpu as pltpu


NBUF = 32  # rolling window of outstanding row-gather DMAs (power of 2)


def _soft_prompt_kernel(ids_ref, prompt_ref, table_hbm, out_ref, sems, *, gather_cols):
    """ids_ref:    SMEM (B*(S-n_toks),) int32 gathered token ids (flattened, pre-clamped).
    prompt_ref:    VMEM (n_toks, D_row) soft-prompt rows.
    table_hbm:     HBM  (vocab, D_row) embedding table (memory_space=pl.ANY).
    out_ref:       VMEM (1, St, D_row) output block for (batch row b, seq tile j).
    sems:          DMA semaphores, shape (NBUF,).
    gather_cols:   static int, S - n_toks (gathered columns per batch row)."""
    b = pl.program_id(0)
    j = pl.program_id(1)
    n_toks = prompt_ref.shape[0]
    st = out_ref.shape[1]

    # Per-tile gather range.  The soft prompt lives entirely in seq tile 0
    # (wrapper enforces St >= n_toks), so tile 0 gathers rows [n_toks, St) and
    # every other tile gathers all St rows.
    local_off = jnp.where(j == 0, n_toks, 0)           # first gathered row within the tile
    n_gather = st - local_off                           # rows gathered in this tile
    # Base into the flattened (B*(S-n_toks),) gathered-id array for this tile.
    ids_base = b * gather_cols + j * st + local_off - n_toks

    def copy_desc(idx, s, slot):
        # Single (1, D_row) row copy.  issue() and wait() both build their
        # descriptor here, so the byte count used for semaphore accounting is
        # identical by construction.
        return pltpu.make_async_copy(
            table_hbm.at[pl.ds(idx, 1), :],
            out_ref.at[0, pl.ds(s, 1), :],
            sems.at[slot],
        )

    def issue(i, idx):
        copy_desc(idx, local_off + i, i & (NBUF - 1)).start()

    def wait(i):
        # Only the semaphore slot and byte count matter for the wait.
        copy_desc(0, 0, i & (NBUF - 1)).wait()

    # 1) Prime the rolling DMA window FIRST so gathers are already in flight
    #    while the soft-prompt slab store below occupies the vld/vst slots.
    n_prime = jnp.minimum(NBUF, n_gather)

    @pl.loop(0, n_prime)
    def _(i):
        issue(i, ids_ref[ids_base + i])

    # 2) Soft-prompt rows: identical for every batch row, only present in seq
    #    tile 0 -> one contiguous slab store, overlapped with the primed DMAs.
    if n_toks > 0:
        @pl.when(j == 0)
        def _():
            out_ref[0, 0:n_toks, :] = prompt_ref[...]

    # 3) Steady state: hoist the SMEM id read for the refill ABOVE the wait
    #    (wait() breaks SMEM sst->sld forwarding), retire DMA i, then refill
    #    the just-freed slot with DMA i + NBUF.
    @pl.loop(0, n_gather)
    def _(i):
        nxt = i + NBUF
        has_next = nxt < n_gather
        idx_next = ids_ref[ids_base + jnp.where(has_next, nxt, 0)]
        wait(i)

        @pl.when(has_next)
        def _():
            issue(nxt, idx_next)


def _choose_seq_tile(S, n_toks, row_bytes, target_bytes):
    """Largest St that (a) divides S, (b) is a multiple of 8, (c) >= n_toks and
    (d) keeps St*row_bytes <= target_bytes.  Falls back to St = S."""
    if S * row_bytes <= target_bytes:
        return S
    max_st = max(8, int(target_bytes // row_bytes))
    for st in range(min(S - 1, max_st), 7, -1):
        if st % 8 == 0 and S % st == 0 and st >= n_toks:
            return st
    return S  # no suitable divisor -> single tile (vmem limit raised accordingly)


def soft_prompt_embedding(x, model_emb_weight, trainable_embs,
                          *, seq_block_target_bytes=16 << 20):
    """x: (B, S) int token ids
    model_emb_weight: (vocab, D) embedding table
    trainable_embs:   (1, n_toks, D) soft prompt
    returns (B, S, D) in the table's dtype."""
    B, S = x.shape
    vocab, D = model_emb_weight.shape
    n_toks = trainable_embs.shape[1]
    assert n_toks >= 1, "soft prompt must have at least one token"
    assert S >= n_toks, "sequence must be at least as long as the soft prompt"

    dtype = model_emb_weight.dtype
    prompt = trainable_embs[0].astype(dtype)  # (n_toks, D)

    if S == n_toks:  # nothing to gather
        return jnp.broadcast_to(prompt[None], (B, n_toks, D))

    # Gathered columns only, flattened 1-D (smaller SMEM footprint than (B,S)).
    # Defensive clamp: TPU dynamic addressing has no runtime bounds check.
    ids = jnp.clip(x[:, n_toks:].astype(jnp.int32), 0, vocab - 1).reshape(-1)

    # Sub-32-bit tables: pack to a uint32 view so each gathered row is a dense
    # 32-bit line (avoids sublane-packed partial-word writes from concurrent DMAs).
    itemsize = jnp.dtype(dtype).itemsize
    pack = 1
    if itemsize < 4 and D % (4 // itemsize) == 0:
        pack = 4 // itemsize
        d_row = D // pack
        table = jax.lax.bitcast_convert_type(
            model_emb_weight.reshape(vocab, d_row, pack), jnp.uint32)
        prompt_k = jax.lax.bitcast_convert_type(
            prompt.reshape(n_toks, d_row, pack), jnp.uint32)
        kern_dtype = jnp.uint32
    else:
        d_row = D
        table = model_emb_weight
        prompt_k = prompt
        kern_dtype = dtype

    row_bytes = d_row * jnp.dtype(kern_dtype).itemsize
    st = _choose_seq_tile(S, n_toks, row_bytes, seq_block_target_bytes)
    n_seq_tiles = S // st

    # Double-buffered output block + double-buffered prompt + headroom.
    vmem_limit = max(32 << 20,
                     int(2 * st * row_bytes + 2 * n_toks * row_bytes + (8 << 20)))

    grid_spec = pltpu.PrefetchScalarGridSpec(
        num_scalar_prefetch=1,
        grid=(B, n_seq_tiles),
        in_specs=[
            # Tiny soft-prompt tile, resident in VMEM.
            pl.BlockSpec((n_toks, d_row), lambda b, j, ids: (0, 0)),
            # Embedding table stays in HBM; rows are DMA-gathered on demand.
            pl.BlockSpec(memory_space=pl.ANY),
        ],
        out_specs=pl.BlockSpec((1, st, d_row), lambda b, j, ids: (b, j, 0)),
        scratch_shapes=[pltpu.SemaphoreType.DMA((NBUF,))],
    )

    kernel = functools.partial(_soft_prompt_kernel, gather_cols=S - n_toks)

    out = pl.pallas_call(
        kernel,
        out_shape=jax.ShapeDtypeStruct((B, S, d_row), kern_dtype),
        grid_spec=grid_spec,
        compiler_params=pltpu.CompilerParams(
            dimension_semantics=("parallel", "arbitrary"),
            vmem_limit_bytes=vmem_limit,
        ),
    )(ids, prompt_k, table)

    if pack > 1:
        out = jax.lax.bitcast_convert_type(out, dtype).reshape(B, S, D)
    return out


def _reference(x, w, trainable_embs):
    B = x.shape[0]
    n_toks = trainable_embs.shape[1]
    D = w.shape[1]
    return jnp.concatenate(
        [jnp.broadcast_to(trainable_embs.astype(w.dtype), (B, n_toks, D)),
         w[x[:, n_toks:]]],
        axis=1,
    )


if __name__ == "__main__":
    key = jax.random.PRNGKey(0)
    k_emb, k_prompt, k_ids = jax.random.split(key, 3)

    # --- Test 1: f32, single seq tile (small shapes from the module's forward) ---
    B, S, n_toks, vocab, D = 2, 8, 3, 32, 128
    w32 = jax.random.normal(k_emb, (vocab, D), dtype=jnp.float32)
    p32 = jax.random.normal(k_prompt, (1, n_toks, D), dtype=jnp.float32)
    x = jax.random.randint(k_ids, (B, S), 0, vocab, dtype=jnp.int32)

    out = jax.block_until_ready(soft_prompt_embedding(x, w32, p32))
    ref = _reference(x, w32, p32)
    assert out.shape == (B, S, D), out.shape
    assert jnp.allclose(out, ref, atol=1e-6, rtol=1e-6), "f32 mismatch vs reference"

    # --- Test 2: bf16 table (exercises the packed-uint32 gather path) ---
    w16 = w32.astype(jnp.bfloat16)
    p16 = p32.astype(jnp.bfloat16)
    out16 = jax.block_until_ready(soft_prompt_embedding(x, w16, p16))
    ref16 = _reference(x, w16, p16)
    assert out16.dtype == jnp.bfloat16 and out16.shape == (B, S, D)
    assert jnp.array_equal(out16, ref16), "bf16 mismatch vs reference"

    # --- Test 3: forced sequence tiling (St=16, 4 tiles) ---
    S2 = 64
    x2 = jax.random.randint(jax.random.PRNGKey(1), (B, S2), 0, vocab, dtype=jnp.int32)
    out2 = jax.block_until_ready(
        soft_prompt_embedding(x2, w32, p32, seq_block_target_bytes=8 * 1024))
    ref2 = _reference(x2, w32, p32)
    assert out2.shape == (B, S2, D)
    assert jnp.allclose(out2, ref2, atol=1e-6, rtol=1e-6), "tiled mismatch vs reference"

    print("KERNEL_OK")
</pallas_src>

<mosaic_0001>
module attributes {stable_mosaic.version = 11 : i64} {
  func.func @_soft_prompt_kernel(%arg0: i32, %arg1: i32, %arg2: memref<10xi32, #tpu.memory_space<smem>>, %arg3: memref<3x128xf32, #tpu.memory_space<vmem>>, %arg4: memref<32x128xf32, #tpu.memory_space<any>>, %arg5: memref<1x8x128xf32, #tpu.memory_space<vmem>>, %arg6: memref<32x!tpu.dma_semaphore, #tpu.memory_space<semaphore_mem>>) attributes {dimension_semantics = [#tpu.dimension_semantics<parallel>, #tpu.dimension_semantics<arbitrary>], iteration_bounds = array<i64: 2, 1>, scalar_prefetch = 1 : i64, scratch_operands = 1 : i64, tpu.core_type = #tpu.core_type<tc>, window_params = [{pipeline_mode = #tpu.pipeline_mode<synchronous>, transform_indices = @transform_0, window_bounds = array<i64: 3, 128>}, {}, {transform_indices = @transform_2, window_bounds = array<i64: 1, 8, 128>}]} {
    %c0_i32 = arith.constant 0 : i32
    %0 = arith.cmpi eq, %arg1, %c0_i32 : i32
    %c3_i32 = arith.constant 3 : i32
    %c0_i32_0 = arith.constant 0 : i32
    %1 = arith.select %0, %c3_i32, %c0_i32_0 : i32
    %c8_i32 = arith.constant 8 : i32
    %2 = arith.subi %c8_i32, %1 : i32
    %c5_i32 = arith.constant 5 : i32
    %3 = arith.muli %arg0, %c5_i32 : i32
    %c8_i32_1 = arith.constant 8 : i32
    %4 = arith.muli %arg1, %c8_i32_1 : i32
    %5 = arith.addi %3, %4 : i32
    %6 = arith.addi %5, %1 : i32
    %c3_i32_2 = arith.constant 3 : i32
    %7 = arith.subi %6, %c3_i32_2 : i32
    %c32_i32 = arith.constant 32 : i32
    %8 = arith.minsi %c32_i32, %2 : i32
    %c0_i32_3 = arith.constant 0 : i32
    %9 = arith.subi %8, %c0_i32_3 : i32
    %c1_i32 = arith.constant 1 : i32
    %c1_i32_4 = arith.constant 1 : i32
    %10 = arith.subi %c1_i32, %c1_i32_4 : i32
    %11 = arith.addi %9, %10 : i32
    %c1_i32_5 = arith.constant 1 : i32
    %12 = arith.divsi %11, %c1_i32_5 : i32
    %c1_i32_6 = arith.constant 1 : i32
    %c0_i32_7 = arith.constant 0 : i32
    %c0_i32_8 = arith.constant 0 : i32
    %13 = arith.subi %12, %c0_i32_8 : i32
    %14 = arith.addi %c0_i32_8, %13 : i32
    %c1_i32_9 = arith.constant 1 : i32
    scf.for %arg7 = %c0_i32_8 to %14 step %c1_i32_9  : i32 {
      %24 = arith.muli %arg7, %c1_i32_6 : i32
      %25 = arith.addi %c0_i32_7, %24 : i32
      %26 = arith.addi %7, %25 : i32
      %27 = arith.index_cast %26 : i32 to index
      %28 = memref.load %arg2[%27] : memref<10xi32, #tpu.memory_space<smem>>
      %29 = arith.addi %1, %25 : i32
      %c31_i32 = arith.constant 31 : i32
      %30 = arith.andi %25, %c31_i32 : i32
      %c0_i32_20 = arith.constant 0 : i32
      %c0_i32_21 = arith.constant 0 : i32
      %31 = tpu.memref_slice %arg4[%28, %c0_i32_21] : memref<32x128xf32, #tpu.memory_space<any>> -> memref<1x128xf32, #tpu.memory_space<any>>
      %c0_i32_22 = arith.constant 0 : i32
      %32 = tpu.memref_slice %arg5[%c0_i32_20, %29, %c0_i32_22] : memref<1x8x128xf32, #tpu.memory_space<vmem>> -> memref<1x1x128xf32, #tpu.memory_space<vmem>>
      %33 = tpu.memref_squeeze %32 : memref<1x1x128xf32, #tpu.memory_space<vmem>> -> memref<1x128xf32, #tpu.memory_space<vmem>>
      %34 = tpu.memref_slice %arg6[%30] : memref<32x!tpu.dma_semaphore, #tpu.memory_space<semaphore_mem>> -> memref<1x!tpu.dma_semaphore, #tpu.memory_space<semaphore_mem>>
      %35 = tpu.memref_squeeze %34 : memref<1x!tpu.dma_semaphore, #tpu.memory_space<semaphore_mem>> -> memref<!tpu.dma_semaphore, #tpu.memory_space<semaphore_mem>>
      tpu.enqueue_dma source(%31 : memref<1x128xf32, #tpu.memory_space<any>>) target(%33 : memref<1x128xf32, #tpu.memory_space<vmem>>) target_semaphore(%35 : memref<!tpu.dma_semaphore, #tpu.memory_space<semaphore_mem>>)
    }
    %c0_i32_10 = arith.constant 0 : i32
    %15 = arith.cmpi eq, %arg1, %c0_i32_10 : i32
    %16 = arith.extui %15 : i1 to i32
    %c0_i32_11 = arith.constant 0 : i32
    %17 = arith.cmpi ne, %16, %c0_i32_11 : i32
    scf.if %17 {
      %c0 = arith.constant 0 : index
      %c0_20 = arith.constant 0 : index
      %24 = vector.load %arg3[%c0, %c0_20] : memref<3x128xf32, #tpu.memory_space<vmem>>, vector<3x128xf32>
      %c0_21 = arith.constant 0 : index
      %c0_22 = arith.constant 0 : index
      %c0_23 = arith.constant 0 : index
      %25 = vector.load %arg5[%c0_21, %c0_22, %c0_23] : memref<1x8x128xf32, #tpu.memory_space<vmem>>, vector<1x3x128xf32>
      %26 = vector.shape_cast %25 : vector<1x3x128xf32> to vector<3x128xf32>
      %27 = vector.shape_cast %24 : vector<3x128xf32> to vector<1x3x128xf32>
      tpu.vector_store %arg5[%c0_21, %c0_22, %c0_23], %27 {strides = array<i32>} : memref<1x8x128xf32, #tpu.memory_space<vmem>>, vector<1x3x128xf32>,
    } else {
    }
    %c0_i32_12 = arith.constant 0 : i32
    %18 = arith.subi %2, %c0_i32_12 : i32
    %c1_i32_13 = arith.constant 1 : i32
    %c1_i32_14 = arith.constant 1 : i32
    %19 = arith.subi %c1_i32_13, %c1_i32_14 : i32
    %20 = arith.addi %18, %19 : i32
    %c1_i32_15 = arith.constant 1 : i32
    %21 = arith.divsi %20, %c1_i32_15 : i32
    %c1_i32_16 = arith.constant 1 : i32
    %c0_i32_17 = arith.constant 0 : i32
    %c0_i32_18 = arith.constant 0 : i32
    %22 = arith.subi %21, %c0_i32_18 : i32
    %23 = arith.addi %c0_i32_18, %22 : i32
    %c1_i32_19 = arith.constant 1 : i32
    scf.for %arg7 = %c0_i32_18 to %23 step %c1_i32_19  : i32 {
      %24 = arith.muli %arg7, %c1_i32_16 : i32
      %25 = arith.addi %c0_i32_17, %24 : i32
      %c32_i32_20 = arith.constant 32 : i32
      %26 = arith.addi %25, %c32_i32_20 : i32
      %27 = arith.cmpi slt, %26, %2 : i32
      %c0_i32_21 = arith.constant 0 : i32
      %28 = arith.select %27, %26, %c0_i32_21 : i32
      %29 = arith.addi %7, %28 : i32
      %30 = arith.index_cast %29 : i32 to index
      %31 = memref.load %arg2[%30] : memref<10xi32, #tpu.memory_space<smem>>
      %c31_i32 = arith.constant 31 : i32
      %32 = arith.andi %25, %c31_i32 : i32
      %c0_i32_22 = arith.constant 0 : i32
      %c0_i32_23 = arith.constant 0 : i32
      %c0_i32_24 = arith.constant 0 : i32
      %33 = tpu.memref_slice %arg4[%c0_i32_23, %c0_i32_24] : memref<32x128xf32, #tpu.memory_space<any>> -> memref<1x128xf32, #tpu.memory_space<any>>
      %c0_i32_25 = arith.constant 0 : i32
      %c0_i32_26 = arith.constant 0 : i32
      %34 = tpu.memref_slice %arg5[%c0_i32_22, %c0_i32_25, %c0_i32_26] : memref<1x8x128xf32, #tpu.memory_space<vmem>> -> memref<1x1x128xf32, #tpu.memory_space<vmem>>
      %35 = tpu.memref_squeeze %34 : memref<1x1x128xf32, #tpu.memory_space<vmem>> -> memref<1x128xf32, #tpu.memory_space<vmem>>
      %36 = tpu.memref_slice %arg6[%32] : memref<32x!tpu.dma_semaphore, #tpu.memory_space<semaphore_mem>> -> memref<1x!tpu.dma_semaphore, #tpu.memory_space<semaphore_mem>>
      %37 = tpu.memref_squeeze %36 : memref<1x!tpu.dma_semaphore, #tpu.memory_space<semaphore_mem>> -> memref<!tpu.dma_semaphore, #tpu.memory_space<semaphore_mem>>
      tpu.wait_dma2 semaphore(%37 : memref<!tpu.dma_semaphore, #tpu.memory_space<semaphore_mem>>) src(%33 : memref<1x128xf32, #tpu.memory_space<any>>) dst(%35 : memref<1x128xf32, #tpu.memory_space<vmem>>)
      %38 = arith.extui %27 : i1 to i32
      %c0_i32_27 = arith.constant 0 : i32
      %39 = arith.cmpi ne, %38, %c0_i32_27 : i32
      scf.if %39 {
        %40 = arith.addi %1, %26 : i32
        %c31_i32_28 = arith.constant 31 : i32
        %41 = arith.andi %26, %c31_i32_28 : i32
        %c0_i32_29 = arith.constant 0 : i32
        %c0_i32_30 = arith.constant 0 : i32
        %42 = tpu.memref_slice %arg4[%31, %c0_i32_30] : memref<32x128xf32, #tpu.memory_space<any>> -> memref<1x128xf32, #tpu.memory_space<any>>
        %c0_i32_31 = arith.constant 0 : i32
        %43 = tpu.memref_slice %arg5[%c0_i32_29, %40, %c0_i32_31] : memref<1x8x128xf32, #tpu.memory_space<vmem>> -> memref<1x1x128xf32, #tpu.memory_space<vmem>>
        %44 = tpu.memref_squeeze %43 : memref<1x1x128xf32, #tpu.memory_space<vmem>> -> memref<1x128xf32, #tpu.memory_space<vmem>>
        %45 = tpu.memref_slice %arg6[%41] : memref<32x!tpu.dma_semaphore, #tpu.memory_space<semaphore_mem>> -> memref<1x!tpu.dma_semaphore, #tpu.memory_space<semaphore_mem>>
        %46 = tpu.memref_squeeze %45 : memref<1x!tpu.dma_semaphore, #tpu.memory_space<semaphore_mem>> -> memref<!tpu.dma_semaphore, #tpu.memory_space<semaphore_mem>>
        tpu.enqueue_dma source(%42 : memref<1x128xf32, #tpu.memory_space<any>>) target(%44 : memref<1x128xf32, #tpu.memory_space<vmem>>) target_semaphore(%46 : memref<!tpu.dma_semaphore, #tpu.memory_space<semaphore_mem>>)
      } else {
      }
    }
    return
  }
  func.func @transform_0(%arg0: i32, %arg1: i32, %arg2: memref<10xi32, #tpu.memory_space<smem>>) -> (i32, i32) {
    %c0_i32 = arith.constant 0 : i32
    %c0_i32_0 = arith.constant 0 : i32
    %c0_i32_1 = arith.constant 0 : i32
    return %c0_i32, %c0_i32_0 : i32, i32
  }
  func.func @transform_2(%arg0: i32, %arg1: i32, %arg2: memref<10xi32, #tpu.memory_space<smem>>) -> (i32, i32, i32) {
    %c0_i32 = arith.constant 0 : i32
    %c0_i32_0 = arith.constant 0 : i32
    return %arg0, %arg1, %c0_i32 : i32, i32, i32
  }
}

</mosaic_0001>

<llo_original>
// kernel: tpu_custom_call.1
$region0: #{tpu_custom_call.1}
  #allocation0 [shape = 'u32[]', space=smem, size = 0x4, offset = 0x4, fixed_abs, tag = 'smem constant byte address 0x4 - core index']
  #allocation1 [shape = 'u32[144,128]{1,0:T(1,128)}', space=vmem, size = 0x12000, scoped, tag = 'internal scratch']
  #allocation2 [shape = 's32[32]{0}', space=sflag, size = 0x80, scoped, tag = 'scratch operand']
  #allocation3 [shape = 's32[1]{0}', space=sflag, size = 0x4, scoped, tag = 'scoped memory for tpu_custom_call.1']
  #allocation4 [shape = 'u8[512]{0}', space=smem, size = 0x200, scoped, tag = 'prefetched SMEM operand 0']
  #allocation9 [shape = 's32[]', space=sflag, size = 0x4, offset = 0, fixed_abs, tag = 'sflag constant byte address 0x0 - dummy sync flag']
  #allocation10 [shape = 's32[]', space=sflag, size = 0x4, offset = 0, fixed_abs, tag = 'sflag constant byte address 0x0 - dummy sync flag']
  #allocation11 [shape = 'u32[]', space=smem, size = 0x4, offset = 0x44, fixed_abs, tag = 'smem constant byte address 0x44 - assertion arg 0']
  #allocation12 [shape = 'u32[]', space=smem, size = 0x4, offset = 0x48, fixed_abs, tag = 'smem constant byte address 0x48 - assertion arg 1']
  #allocation13 [shape = 's32[]', space=sflag, size = 0x4, offset = 0, fixed_abs, tag = 'sflag constant byte address 0x0 - dummy sync flag']
  #allocation14 [shape = 's32[]', space=sflag, size = 0x4, offset = 0, fixed_abs, tag = 'sflag constant byte address 0x0 - dummy sync flag']
  %s0 = inlined_call_operand.hbm [shape: s32[10], index: 0, kind: input, shape index: {}]
  %s1 = inlined_call_operand.hbm [shape: f32[3,128], index: 1, kind: input, shape index: {}]
  %s2 = inlined_call_operand.hbm [shape: f32[32,128], index: 2, kind: input, shape index: {}]
  %s3 = inlined_call_operand.hbm [shape: f32[2,8,128], index: 3, kind: output, shape index: {}]
  %s4 = sld [smem:[#allocation0]]
  $region71: #{tpu_custom_call.1} parent=0
    _
  %s6 = ssub.s32 1, %s4
  %s7 = scalar_select 0, %s6, %s4
  %9 = dma.hbm_to_smem %s0, 16, [#allocation4], [#allocation3]
  %10 = dma.done [#allocation3], 16
  %11 = sfence
  $region1: #{tpu_custom_call.1} parent=0
    #allocation5 [shape = 'u8[2048]{0}', space=vmem, size = 0x800, scoped, tag = 'input window, operand 1, single buffered']
    #allocation6 [shape = 's32[2]{0}', space=sflag, size = 0x8, scoped, tag = 'scoped memory for tpu_custom_call.1']
    #allocation7 [shape = 's32[2]{0}', space=sflag, size = 0x8, scoped, tag = 'scoped memory for tpu_custom_call.1']
    #allocation8 [shape = 'u8[8192]{0}', space=vmem, size = 0x2000, scoped, tag = 'output window, operand 0']
    %12 = vsyncpa [#allocation6], 0
    %13 = vsyncpa [#allocation7], 0
    %s14 = scalar_lea.sflag [#allocation7], 1
    %15 = vsyncpa %s14, 0
    loop: start=0, step=1, limit=4
    $region2: #{tpu_custom_call.1} parent=1 // loop_pre_header
      _
    $region3: #{tpu_custom_call.1} parent=1 // loop_header
      %s17 = sphi 0, %s21
      %p18 = scmp.ge.s32.totalorder %s17, 4
      %s24 = sphi 0, %s36
      %s25 = sphi 0, %s32
      %s26 = sphi 0, %s24
      %s27 = sphi 0, %s25
      %s28 = sphi 0, %s26
      %s29 = sphi 0, %s27
      %s37 = sphi 0, %s37
      %s39 = sphi 0, %s37
      %s40 = sphi 0, %s39
      %s54 = sphi 0, %s40
      %s62 = sphi 0, %s64
      %s65 = sphi 0, %s62
      %s66 = sphi 0, %s65
      %s82 = sphi 0, %s66
    $region4: #{tpu_custom_call.1} parent=1 // loop_header_branch
      %20 = sbr.rel (%p18) target = $region8
    $region5: #{tpu_custom_call.1} parent=1 // loop_body
      %s22 = ssub.s32 %s17, 1
      %s23 = ssub.s32 %s17, 2
      %s30 = sadd.s32 1, %s25
      %p31 = scmp.ge.s32.totalorder %s30, 1
      %s32 = scalar_select %p31, 0, %s30
      %s33 = sadd.s32 1, %s24
      %s34 = scalar_select %p31, %s33, %s24
      %p35 = scmp.ge.s32.totalorder %s34, 2
      %s36 = scalar_select %p35, 0, %s34
      %s38 = sadd.s32 %s37, 1
      %p41 = scmp.eq.s32.totalorder %s17, 1
      %p42 = scmp.ne.s32.totalorder %s37, %s39
      %p43 = scmp.eq.s32.totalorder %s17, 0
      %p44 = por %p42, %p43
      %p45 = scmp.ne.s32.totalorder %s37, %s39
      %p46 = scmp.eq.s32.totalorder %s22, 1
      %p47 = por %p45, %p46
      %p48 = scmp.ne.s32.totalorder %s39, %s40
      %p49 = scmp.eq.s32.totalorder %s22, 0
      %p50 = por %p48, %p49
      %p51 = scmp.ne.s32.totalorder %s39, %s40
      %p52 = scmp.eq.s32.totalorder %s23, 1
      %p53 = por %p51, %p52
      %p55 = scmp.ne.s32.totalorder %s40, %s54
      %p56 = scmp.eq.s32.totalorder %s23, 0
      %p57 = por %p55, %p56
      %s58 = ssub.s32 %s24, %s36
      %s59 = ssub.s32 %s25, %s32
      %s60 = sor.u32 %s58, %s59
      %p61 = scmp.eq.s32.totalorder %s60, 0
      %s63 = sadd.s32 %s62, 1
      %s64 = scalar_select %p61, %s62, %s63
      %p67 = pneg %p61
      %p68 = scmp.eq.s32.totalorder %s17, 1
      %p69 = por %p67, %p68
      %p70 = scmp.ne.s32.totalorder %s62, %s65
      %p71 = scmp.eq.s32.totalorder %s17, 0
      %p72 = por %p70, %p71
      %p73 = scmp.ne.s32.totalorder %s62, %s65
      %p74 = scmp.eq.s32.totalorder %s22, 1
      %p75 = por %p73, %p74
      %p76 = scmp.ne.s32.totalorder %s65, %s66
      %p77 = scmp.eq.s32.totalorder %s22, 0
      %p78 = por %p76, %p77
      %p79 = scmp.ne.s32.totalorder %s65, %s66
      %p80 = scmp.eq.s32.totalorder %s23, 1
      %p81 = por %p79, %p80
      %p83 = scmp.ne.s32.totalorder %s66, %s82
      %p84 = scmp.eq.s32.totalorder %s23, 0
      %p85 = por %p83, %p84
      %p86 = scmp.le.s32.totalorder 1, %s17
      %p87 = scmp.lt.s32.totalorder %s17, 3
      %p88 = pnand %p86, %p87
      %p89 = pneg %p88
      // Predicated region
      $region9: #{tpu_custom_call.1} parent=5 // pred_check
        _
      $region10: #{tpu_custom_call.1} parent=5 // pred_check_branch
        %91 = sbr.rel (%p88) target = $region12
      $region11: #{tpu_custom_call.1} parent=5 // pred_region
        %s92 = ssub.s32 %s17, 1
        // Predicated region
        $region13: #{tpu_custom_call.1} parent=11 // pred_check
          %p93 = pneg %p50
        $region14: #{tpu_custom_call.1} parent=11 // pred_check_branch
          %95 = sbr.rel (%p93) target = $region16
        $region15: #{tpu_custom_call.1} parent=11 // pred_region
          %s97 = ssub.s32 64, 64
          %98 = vsyncadd [#allocation6], %s97
          %s100 = sshll.u32 [#allocation5], 4
          %s101 = int_to_ptr.vmem [resolvable:$true] %s100
          %103 = dma.hbm_to_vmem [thread:$0]  %s1, 64, %s101, [#allocation6]
        $region16: #{tpu_custom_call.1} parent=11 // pred_fallthru
          _
      $region12: #{tpu_custom_call.1} parent=5 // pred_fallthru
        _
      %p104 = scmp.lt.s32.totalorder %s17, 2
      // Predicated region
      $region17: #{tpu_custom_call.1} parent=5 // pred_check
        %p105 = pneg %p104
      $region18: #{tpu_custom_call.1} parent=5 // pred_check_branch
        %107 = sbr.rel (%p105) target = $region20
      $region19: #{tpu_custom_call.1} parent=5 // pred_region
        _
      $region20: #{tpu_custom_call.1} parent=5 // pred_fallthru
        _
      %p108 = scmp.le.s32.totalorder 1, %s17
      %p109 = scmp.lt.s32.totalorder %s17, 3
      %p110 = pnand %p108, %p109
      %p111 = pneg %p110
      // Predicated region
      $region21: #{tpu_custom_call.1} parent=5 // pred_check
        _
      $region22: #{tpu_custom_call.1} parent=5 // pred_check_branch
        %113 = sbr.rel (%p110) target = $region24
      $region23: #{tpu_custom_call.1} parent=5 // pred_region
        %s114 = ssub.s32 %s17, 1
        // Predicated region
        $region25: #{tpu_custom_call.1} parent=23 // pred_check
          %p115 = pneg %p50
        $region26: #{tpu_custom_call.1} parent=23 // pred_check_branch
          %117 = sbr.rel (%p115) target = $region28
        $region27: #{tpu_custom_call.1} parent=23 // pred_region
          %118 = dma.done [#allocation6], 64
        $region28: #{tpu_custom_call.1} parent=23 // pred_fallthru
          _
        %p119 = pneg %p50
        %p120 = pneg %p47
        %p121 = pneg %p78
        %p122 = pneg %p75
        %s123 = sand.u32 %s65, 1
        %s124 = scalar_lea.sflag [#allocation7], %s123
        %s125 = sand.u32 %s65, 1
        %s126 = smul.addr %s125, 8
        %s127 = scalar_lea.vmem [#allocation8], %s126
        %p128 = scmp.eq.s32.totalorder %s27, 0
        %s129 = scalar_select %p128, 3, 0
        %s130 = ssub.s32 8, %s129
        %s131 = smul.u32 %s26, 5
        %s132 = smul.u32 %s27, 8
        %s133 = sadd.s32 %s131, %s132
        %s134 = sadd.s32 %s133, %s129
        %s135 = ssub.s32 %s134, 3
        %p136 = scmp.lt.s32.totalorder %s130, 32
        %s137 = scalar_select %p136, %s130, 32
        // While loop
        $region29: #{tpu_custom_call.1} parent=23 // loop_pre_header
          _
        $region30: #{tpu_custom_call.1} parent=23 // loop_header
          %s139 = sphi 0, %s141
          %p140 = scmp.ge.s32.totalorder %s139, %s137
        $region31: #{tpu_custom_call.1} parent=23 // loop_header_branch
          %143 = sbr.rel (%p140) target = $region35
        $region32: #{tpu_custom_call.1} parent=23 // loop_body
          %s144 = sadd.s32 %s135, %s139
          %s145 = sld [smem:[#allocation4 + %s144]]
          %s146 = sadd.s32 %s129, %s139
          %s147 = sand.u32 %s139, 31
          %s148 = smul.addr %s145, 16
          %s149 = scalar_lea.hbm %s2, %s148
          %s150 = scalar_lea.vmem %s127, %s146 [#allocation8]
          %s151 = scalar_lea.sflag [#allocation2], %s147
          // Predicated region
          $region36: #{tpu_custom_call.1} parent=32 // pred_check
            _
          $region37: #{tpu_custom_call.1} parent=32 // pred_check_branch
            %153 = sbr.rel target = $region39
          $region38: #{tpu_custom_call.1} parent=32 // pred_region
            %154 = sst [smem:[#allocation11]] [#allocation10]
            %155 = sst [smem:[#allocation12]] [#allocation9]
          $region39: #{tpu_custom_call.1} parent=32 // pred_fallthru
            _
          %157 = shalt.err (0)
          %s159 = sshll.u32 %s150, 4
          %s160 = int_to_ptr.vmem [resolvable:$true] %s159
          %162 = dma.hbm_to_vmem [thread:$0]  %s149, 16, %s160, %s151
        $region33: #{tpu_custom_call.1} parent=23 // loop_footer
          %s141 = sadd.s32 %s139, 1
        $region34: #{tpu_custom_call.1} parent=23 // loop_footer_branch
          %138 = sbr.rel target = $region30
        $region35: #{tpu_custom_call.1} parent=23 // loop_exit
          _
        // Predicated region
        $region40: #{tpu_custom_call.1} parent=23 // pred_check
          %p163 = pneg %p128
        $region41: #{tpu_custom_call.1} parent=23 // pred_check_branch
          %165 = sbr.rel (%p163) target = $region43
        $region42: #{tpu_custom_call.1} parent=23 // pred_region
          %v166 = vld [vmem:[#allocation5] sm:$0x7]
          %167 = vst [vmem:[%s127] sm:$0x7] %v166
        $region43: #{tpu_custom_call.1} parent=23 // pred_fallthru
          _
        // While loop
        $region44: #{tpu_custom_call.1} parent=23 // loop_pre_header
          _
        $region45: #{tpu_custom_call.1} parent=23 // loop_header
          %s169 = sphi 0, %s171
          %p170 = scmp.ge.s32.totalorder %s169, %s130
        $region46: #{tpu_custom_call.1} parent=23 // loop_header_branch
          %173 = sbr.rel (%p170) target = $region50
        $region47: #{tpu_custom_call.1} parent=23 // loop_body
          %s174 = sadd.s32 %s169, 32
          %p175 = scmp.lt.s32.totalorder %s174, %s130
          %s176 = scalar_select %p175, %s174, 0
          %s177 = sadd.s32 %s135, %s176
          %s178 = sld [smem:[#allocation4 + %s177]]
          %s179 = sand.u32 %s169, 31
          %s180 = scalar_lea.sflag [#allocation2], %s179
          %s181 = smul.u32 1, 1
          %s182 = sshll.u32 %s181, 4
          %183 = dma.done %s180, %s182
          // Predicated region
          $region51: #{tpu_custom_call.1} parent=47 // pred_check
            %p184 = pneg %p175
          $region52: #{tpu_custom_call.1} parent=47 // pred_check_branch
            %186 = sbr.rel (%p184) target = $region54
          $region53: #{tpu_custom_call.1} parent=47 // pred_region
            %s187 = sadd.s32 %s129, %s174
            %s188 = sand.u32 %s174, 31
            %s189 = smul.addr %s178, 16
            %s190 = scalar_lea.hbm %s2, %s189
            %s191 = scalar_lea.vmem %s127, %s187 [#allocation8]
            %s192 = scalar_lea.sflag [#allocation2], %s188
            // Predicated region
            $region55: #{tpu_custom_call.1} parent=53 // pred_check
              _
            $region56: #{tpu_custom_call.1} parent=53 // pred_check_branch
              %194 = sbr.rel target = $region58
            $region57: #{tpu_custom_call.1} parent=53 // pred_region
              %195 = sst [smem:[#allocation11]] [#allocation14]
              %196 = sst [smem:[#allocation12]] [#allocation13]
            $region58: #{tpu_custom_call.1} parent=53 // pred_fallthru
              _
            %198 = shalt.err (0)
            %s200 = sshll.u32 %s191, 4
            %s201 = int_to_ptr.vmem [resolvable:$true] %s200
            %203 = dma.hbm_to_vmem [thread:$0]  %s190, 16, %s201, %s192
          $region54: #{tpu_custom_call.1} parent=47 // pred_fallthru
            _
        $region48: #{tpu_custom_call.1} parent=23 // loop_footer
          %s171 = sadd.s32 %s169, 1
        $region49: #{tpu_custom_call.1} parent=23 // loop_footer_branch
          %168 = sbr.rel target = $region45
        $region50: #{tpu_custom_call.1} parent=23 // loop_exit
          _
        %s204 = sand.u32 %s65, 1
        %s205 = scalar_lea.sflag [#allocation7], %s204
        %s206 = sand.u32 %s65, 1
        %s207 = smul.addr %s206, 8
        %s208 = scalar_lea.vmem [#allocation8], %s207
        // Predicated region
        $region59: #{tpu_custom_call.1} parent=23 // pred_check
          %p209 = pneg %p75
        $region60: #{tpu_custom_call.1} parent=23 // pred_check_branch
          %211 = sbr.rel (%p209) target = $region62
        $region61: #{tpu_custom_call.1} parent=23 // pred_region
          %s213 = ssub.s32 128, 128
          %214 = vsyncadd %s205, %s213
          %s215 = sadd.s32 %s27, %s26
          %s216 = smul.addr %s215, 128
          %s217 = scalar_lea.hbm %s3, %s216
          %s219 = sshll.u32 %s208, 4
          %s220 = int_to_ptr.vmem [resolvable:$true] %s219
          %222 = dma.vmem_to_hbm [thread:$0]  %s220, 128, %s217, %s205
        $region62: #{tpu_custom_call.1} parent=23 // pred_fallthru
          _
      $region24: #{tpu_custom_call.1} parent=5 // pred_fallthru
        _
      %p223 = scmp.le.s32.totalorder 2, %s17
      // Predicated region
      $region63: #{tpu_custom_call.1} parent=5 // pred_check
        %p224 = pneg %p223
      $region64: #{tpu_custom_call.1} parent=5 // pred_check_branch
        %226 = sbr.rel (%p224) target = $region66
      $region65: #{tpu_custom_call.1} parent=5 // pred_region
        %s227 = ssub.s32 %s17, 2
        // Predicated region
        $region67: #{tpu_custom_call.1} parent=65 // pred_check
          %p228 = pneg %p81
        $region68: #{tpu_custom_call.1} parent=65 // pred_check_branch
          %230 = sbr.rel (%p228) target = $region70
        $region69: #{tpu_custom_call.1} parent=65 // pred_region
          %s231 = sand.u32 %s66, 1
          %s232 = scalar_lea.sflag [#allocation7], %s231
          %s233 = sand.u32 %s66, 1
          %s234 = smul.addr %s233, 8
          %s235 = scalar_lea.vmem [#allocation8], %s234
          %236 = dma.done %s232, 128
        $region70: #{tpu_custom_call.1} parent=65 // pred_fallthru
          _
      $region66: #{tpu_custom_call.1} parent=5 // pred_fallthru
        _
    $region6: #{tpu_custom_call.1} parent=1 // loop_footer
      %s21 = sadd.s32 1, %s17
    $region7: #{tpu_custom_call.1} parent=1 // loop_footer_branch
      %16 = sbr.rel target = $region3
    $region8: #{tpu_custom_call.1} parent=1 // loop_exit
      _
    %237 = vsyncpa [#allocation6], 1
    %s238 = scalar_lea.sflag [#allocation6], 1
    %239 = vsyncpa %s238, 1
    %240 = vsyncpa [#allocation7], 1
    %s241 = scalar_lea.sflag [#allocation7], 1
    %242 = vsyncpa %s241, 1
  %243 = vsyncmov [#allocation2]
  %s244 = vpop.sfrf %243
  %p245 = scmp.eq.s32.totalorder %s244, 0
  %p246 = pneg %p245
  %248 = shalt.err (%p246)
  %s249 = scalar_lea.sflag [#allocation2], 1
  %250 = vsyncmov %s249
  %s251 = vpop.sfrf %250
  %p252 = scmp.eq.s32.totalorder %s251, 0
  %p253 = pneg %p252
  %255 = shalt.err (%p253)
  %s256 = scalar_lea.sflag [#allocation2], 2
  %257 = vsyncmov %s256
  %s258 = vpop.sfrf %257
  %p259 = scmp.eq.s32.totalorder %s258, 0
  %p260 = pneg %p259
  %262 = shalt.err (%p260)
  %s263 = scalar_lea.sflag [#allocation2], 3
  %264 = vsyncmov %s263
  %s265 = vpop.sfrf %264
  %p266 = scmp.eq.s32.totalorder %s265, 0
  %p267 = pneg %p266
  %269 = shalt.err (%p267)
  %s270 = scalar_lea.sflag [#allocation2], 4
  %271 = vsyncmov %s270
  %s272 = vpop.sfrf %271
  %p273 = scmp.eq.s32.totalorder %s272, 0
  %p274 = pneg %p273
  %276 = shalt.err (%p274)
  %s277 = scalar_lea.sflag [#allocation2], 5
  %278 = vsyncmov %s277
  %s279 = vpop.sfrf %278
  %p280 = scmp.eq.s32.totalorder %s279, 0
  %p281 = pneg %p280
  %283 = shalt.err (%p281)
  %s284 = scalar_lea.sflag [#allocation2], 6
  %285 = vsyncmov %s284
  %s286 = vpop.sfrf %285
  %p287 = scmp.eq.s32.totalorder %s286, 0
  %p288 = pneg %p287
  %290 = shalt.err (%p288)
  %s291 = scalar_lea.sflag [#allocation2], 7
  %292 = vsyncmov %s291
  %s293 = vpop.sfrf %292
  %p294 = scmp.eq.s32.totalorder %s293, 0
  %p295 = pneg %p294
  %297 = shalt.err (%p295)
  %s298 = scalar_lea.sflag [#allocation2], 8
  %299 = vsyncmov %s298
  %s300 = vpop.sfrf %299
  %p301 = scmp.eq.s32.totalorder %s300, 0
  %p302 = pneg %p301
  %304 = shalt.err (%p302)
  %s305 = scalar_lea.sflag [#allocation2], 9
  %306 = vsyncmov %s305
  %s307 = vpop.sfrf %306
  %p308 = scmp.eq.s32.totalorder %s307, 0
  %p309 = pneg %p308
  %311 = shalt.err (%p309)
  %s312 = scalar_lea.sflag [#allocation2], 10
  %313 = vsyncmov %s312
  %s314 = vpop.sfrf %313
  %p315 = scmp.eq.s32.totalorder %s314, 0
  %p316 = pneg %p315
  %318 = shalt.err (%p316)
  %s319 = scalar_lea.sflag [#allocation2], 11
  %320 = vsyncmov %s319
  %s321 = vpop.sfrf %320
  %p322 = scmp.eq.s32.totalorder %s321, 0
  %p323 = pneg %p322
  %325 = shalt.err (%p323)
  %s326 = scalar_lea.sflag [#allocation2], 12
  %327 = vsyncmov %s326
  %s328 = vpop.sfrf %327
  %p329 = scmp.eq.s32.totalorder %s328, 0
  %p330 = pneg %p329
  %332 = shalt.err (%p330)
  %s333 = scalar_lea.sflag [#allocation2], 13
  %334 = vsyncmov %s333
  %s335 = vpop.sfrf %334
  %p336 = scmp.eq.s32.totalorder %s335, 0
  %p337 = pneg %p336
  %339 = shalt.err (%p337)
  %s340 = scalar_lea.sflag [#allocation2], 14
  %341 = vsyncmov %s340
  %s342 = vpop.sfrf %341
  %p343 = scmp.eq.s32.totalorder %s342, 0
  %p344 = pneg %p343
  %346 = shalt.err (%p344)
  %s347 = scalar_lea.sflag [#allocation2], 15
  %348 = vsyncmov %s347
  %s349 = vpop.sfrf %348
  %p350 = scmp.eq.s32.totalorder %s349, 0
  %p351 = pneg %p350
  %353 = shalt.err (%p351)
  %s354 = scalar_lea.sflag [#allocation2], 16
  %355 = vsyncmov %s354
  %s356 = vpop.sfrf %355
  %p357 = scmp.eq.s32.totalorder %s356, 0
  %p358 = pneg %p357
  %360 = shalt.err (%p358)
  %s361 = scalar_lea.sflag [#allocation2], 17
  %362 = vsyncmov %s361
  %s363 = vpop.sfrf %362
  %p364 = scmp.eq.s32.totalorder %s363, 0
  %p365 = pneg %p364
  %367 = shalt.err (%p365)
  %s368 = scalar_lea.sflag [#allocation2], 18
  %369 = vsyncmov %s368
  %s370 = vpop.sfrf %369
  %p371 = scmp.eq.s32.totalorder %s370, 0
  %p372 = pneg %p371
  %374 = shalt.err (%p372)
  %s375 = scalar_lea.sflag [#allocation2], 19
  %376 = vsyncmov %s375
  %s377 = vpop.sfrf %376
  %p378 = scmp.eq.s32.totalorder %s377, 0
  %p379 = pneg %p378
  %381 = shalt.err (%p379)
  %s382 = scalar_lea.sflag [#allocation2], 20
  %383 = vsyncmov %s382
  %s384 = vpop.sfrf %383
  %p385 = scmp.eq.s32.totalorder %s384, 0
  %p386 = pneg %p385
  %388 = shalt.err (%p386)
  %s389 = scalar_lea.sflag [#allocation2], 21
  %390 = vsyncmov %s389
  %s391 = vpop.sfrf %390
  %p392 = scmp.eq.s32.totalorder %s391, 0
  %p393 = pneg %p392
  %395 = shalt.err (%p393)
  %s396 = scalar_lea.sflag [#allocation2], 22
  %397 = vsyncmov %s396
  %s398 = vpop.sfrf %397
  %p399 = scmp.eq.s32.totalorder %s398, 0
  %p400 = pneg %p399
  %402 = shalt.err (%p400)
  %s403 = scalar_lea.sflag [#allocation2], 23
  %404 = vsyncmov %s403
  %s405 = vpop.sfrf %404
  %p406 = scmp.eq.s32.totalorder %s405, 0
  %p407 = pneg %p406
  %409 = shalt.err (%p407)
  %s410 = scalar_lea.sflag [#allocation2], 24
  %411 = vsyncmov %s410
  %s412 = vpop.sfrf %411
  %p413 = scmp.eq.s32.totalorder %s412, 0
  %p414 = pneg %p413
  %416 = shalt.err (%p414)
  %s417 = scalar_lea.sflag [#allocation2], 25
  %418 = vsyncmov %s417
  %s419 = vpop.sfrf %418
  %p420 = scmp.eq.s32.totalorder %s419, 0
  %p421 = pneg %p420
  %423 = shalt.err (%p421)
  %s424 = scalar_lea.sflag [#allocation2], 26
  %425 = vsyncmov %s424
  %s426 = vpop.sfrf %425
  %p427 = scmp.eq.s32.totalorder %s426, 0
  %p428 = pneg %p427
  %430 = shalt.err (%p428)
  %s431 = scalar_lea.sflag [#allocation2], 27
  %432 = vsyncmov %s431
  %s433 = vpop.sfrf %432
  %p434 = scmp.eq.s32.totalorder %s433, 0
  %p435 = pneg %p434
  %437 = shalt.err (%p435)
  %s438 = scalar_lea.sflag [#allocation2], 28
  %439 = vsyncmov %s438
  %s440 = vpop.sfrf %439
  %p441 = scmp.eq.s32.totalorder %s440, 0
  %p442 = pneg %p441
  %444 = shalt.err (%p442)
  %s445 = scalar_lea.sflag [#allocation2], 29
  %446 = vsyncmov %s445
  %s447 = vpop.sfrf %446
  %p448 = scmp.eq.s32.totalorder %s447, 0
  %p449 = pneg %p448
  %451 = shalt.err (%p449)
  %s452 = scalar_lea.sflag [#allocation2], 30
  %453 = vsyncmov %s452
  %s454 = vpop.sfrf %453
  %p455 = scmp.eq.s32.totalorder %s454, 0
  %p456 = pneg %p455
  %458 = shalt.err (%p456)
  %s459 = scalar_lea.sflag [#allocation2], 31
  %460 = vsyncmov %s459
  %s461 = vpop.sfrf %460
  %p462 = scmp.eq.s32.totalorder %s461, 0
  %p463 = pneg %p462
  %465 = shalt.err (%p463)

</llo_original>
